<compile_context>
chip_gen: v6e
topology: v6e:2x2x1
jax: 0.10.0
libtpu: 0.0.40
codegen_flags: <defaults>
</compile_context>

<pallas_src>
import functools

import jax
import jax.numpy as jnp
from jax.experimental import pallas as pl
from jax.experimental.pallas import tpu as pltpu


def _meta_transformer_kernel(x_ref, gate_ref, wqkv_ref, woT_ref, lnw_ref,
                             lnb_ref, o_ref, *, head_num, att_dim, e, eps):
    x = x_ref[...]                                   # (L, E) f32
    gate = gate_ref[...]                             # (1, E) f32, *2/sqrt(d) folded

    # Fused Q/K/V projection: one lane-dense (L, E) @ (E, 128) bf16 MXU matmul.
    qkv = jnp.dot(x.astype(jnp.bfloat16), wqkv_ref[...],
                  preferred_element_type=jnp.float32)   # (L, 3E padded to 128)

    q = qkv[:, 0:e] * gate                           # mode='Q', flag='gate'
    k = qkv[:, e:2 * e]
    v = qkv[:, 2 * e:3 * e]

    # Per-head attention (tiny d; kept f32).  Static unroll: head count is small.
    heads = []
    for h in range(head_num):
        lo, hi = h * att_dim, (h + 1) * att_dim
        qh, kh, vh = q[:, lo:hi], k[:, lo:hi], v[:, lo:hi]
        s = jnp.einsum('qd,kd->qk', qh, kh,
                       preferred_element_type=jnp.float32)       # (L, L)
        s = s - jnp.max(s, axis=-1, keepdims=True)
        p = jnp.exp(s)
        p = p * pl.reciprocal(jnp.sum(p, axis=-1, keepdims=True), approx=True)
        # TODO(synk): attn_dropout / dropout omitted (identity in eval mode).
        heads.append(jnp.dot(p, vh, preferred_element_type=jnp.float32))

    # Head concat + fused output projection (single bf16 MXU matmul).
    o_cat = jnp.concatenate(heads, axis=-1)                      # (L, E)
    proj = jnp.dot(o_cat.astype(jnp.bfloat16), woT_ref[...],
                   preferred_element_type=jnp.float32)           # (L, E)

    out = proj + x                                               # residual (f32)
    mean = jnp.mean(out, axis=-1, keepdims=True)
    cen = out - mean
    var = jnp.mean(cen * cen, axis=-1, keepdims=True)
    norm = cen * jax.lax.rsqrt(var + eps)
    o_ref[...] = (norm * lnw_ref[...] + lnb_ref[...]).astype(o_ref.dtype)


def meta_transformer_layer(inputs, mlp_params_q, params, *, head_num):
    """inputs: (B, L, E); mlp_params_q: (B, E).  flag='gate', mode='Q', eval."""
    B, L, E = inputs.shape
    assert E % head_num == 0
    d = E // head_num
    qkv_w = pl.cdiv(3 * E, 128) * 128      # fused-QKV RHS padded to 128 lanes
    f32, bf16 = jnp.float32, jnp.bfloat16

    # Fused, lane-dense projection weight [Wq | Wk | Wv], zero-padded columns.
    w_qkv = jnp.concatenate([params["W_Query"], params["W_Key"],
                             params["W_Value"]], axis=1).astype(f32)   # (E, 3E)
    w_qkv = jnp.pad(w_qkv, ((0, 0), (0, qkv_w - 3 * E))).astype(bf16)  # (E, 128)

    # nn.Linear(bias=False): y = x @ W^T.
    w_oT = params["Out_linear"].T.astype(bf16)                          # (E, E)

    # Gate with *2 and the 1/sqrt(att_dim) score scaling folded in; no L-repeat.
    gate = (mlp_params_q.astype(f32) * (2.0 / float(d) ** 0.5)).reshape(B, 1, E)

    lnw = params["ln_weight"].astype(f32).reshape(1, E)
    lnb = params["ln_bias"].astype(f32).reshape(1, E)
    x = inputs.astype(f32)

    kernel = functools.partial(_meta_transformer_kernel, head_num=head_num,
                               att_dim=d, e=E, eps=1e-6)

    flops = B * (2 * L * E * qkv_w             # fused QKV projection
                 + head_num * 4 * L * L * d    # scores + p@v
                 + 2 * L * E * E)              # fused output projection
    cost = pl.CostEstimate(
        flops=flops,
        transcendentals=B * (head_num * L * L + 2 * L),
        bytes_accessed=(8 * B * L * E              # x in + out (f32)
                        + 4 * B * E                # gate
                        + 2 * (E * qkv_w + E * E)  # bf16 weights
                        + 8 * E))                  # LN params

    out = pl.pallas_call(
        kernel,
        grid=(B,),
        in_specs=[
            pl.BlockSpec((None, L, E), lambda b: (b, 0, 0)),   # x
            pl.BlockSpec((None, 1, E), lambda b: (b, 0, 0)),   # gate
            pl.BlockSpec((E, qkv_w), lambda b: (0, 0)),        # fused QKV weight
            pl.BlockSpec((E, E), lambda b: (0, 0)),            # Out_linear^T
            pl.BlockSpec((1, E), lambda b: (0, 0)),            # LN weight
            pl.BlockSpec((1, E), lambda b: (0, 0)),            # LN bias
        ],
        out_specs=pl.BlockSpec((None, L, E), lambda b: (b, 0, 0)),
        out_shape=jax.ShapeDtypeStruct((B, L, E), jnp.float32),
        compiler_params=pltpu.CompilerParams(
            dimension_semantics=("parallel",),
            vmem_limit_bytes=32 * 1024 * 1024),
        cost_estimate=cost,
    )(x, gate, w_qkv, w_oT, lnw, lnb)

    return out.astype(inputs.dtype)


def _reference(inputs, mlp_params_q, params, *, head_num):
    """Pure-JAX replica of the PyTorch forward (flag='gate', mode='Q', eval)."""
    B, L, E = inputs.shape
    d = E // head_num
    q = inputs @ params["W_Query"]
    k = inputs @ params["W_Key"]
    v = inputs @ params["W_Value"]
    q = q * mlp_params_q[:, None, :] * 2.0
    qh = jnp.stack(jnp.split(q, head_num, axis=2))          # (H, B, L, d)
    kh = jnp.stack(jnp.split(k, head_num, axis=2))
    vh = jnp.stack(jnp.split(v, head_num, axis=2))
    s = jnp.einsum('hbik,hbjk->hbij', qh, kh) / jnp.sqrt(jnp.float32(d))
    p = jax.nn.softmax(s, axis=-1)
    r = jnp.matmul(p, vh)                                    # (H, B, L, d)
    r = jnp.concatenate(jnp.split(r, head_num, axis=0), axis=-1)[0]   # (B, L, E)
    r = r @ params["Out_linear"].T
    r = r + inputs
    mean = jnp.mean(r, axis=-1, keepdims=True)
    var = jnp.mean((r - mean) ** 2, axis=-1, keepdims=True)
    r = (r - mean) / jnp.sqrt(var + 1e-6)
    return r * params["ln_weight"] + params["ln_bias"]


if __name__ == "__main__":
    B, L, E, H = 2, 8, 32, 2

    key = jax.random.PRNGKey(0)
    k_x, k_g, k_wq, k_wk, k_wv, k_wo, k_lw, k_lb = jax.random.split(key, 8)

    # Deterministic parameter init: normal(mean=0, std=0.05) like nn.init.normal_.
    params = {
        "W_Query":    0.05 * jax.random.normal(k_wq, (E, E), jnp.float32),
        "W_Key":      0.05 * jax.random.normal(k_wk, (E, E), jnp.float32),
        "W_Value":    0.05 * jax.random.normal(k_wv, (E, E), jnp.float32),
        "Out_linear": 0.05 * jax.random.normal(k_wo, (E, E), jnp.float32),
        "ln_weight":  0.05 * jax.random.normal(k_lw, (E,),   jnp.float32),
        "ln_bias":    0.05 * jax.random.normal(k_lb, (E,),   jnp.float32),
    }

    x = jax.random.normal(k_x, (B, L, E), jnp.float32)
    mlp_params_q = jax.random.normal(k_g, (B, E), jnp.float32)

    layer = jax.jit(functools.partial(meta_transformer_layer, head_num=H))
    out = jax.block_until_ready(layer(x, mlp_params_q, params))

    ref = _reference(x, mlp_params_q, params, head_num=H)
    assert out.shape == (B, L, E)
    # Tolerance loosened vs. pure-f32 build: the projection / output matmuls
    # now run with bf16 operands (f32 accumulation) per the perf review.
    assert jnp.allclose(out, ref, atol=5e-3, rtol=5e-3)

    print("KERNEL_OK")
</pallas_src>

<mosaic_0001>
module attributes {stable_mosaic.version = 11 : i64} {
  func.func @_meta_transformer_kernel(%arg0: i32, %arg1: memref<1x8x32xf32, #tpu.memory_space<vmem>>, %arg2: memref<1x1x32xf32, #tpu.memory_space<vmem>>, %arg3: memref<32x128xbf16, #tpu.memory_space<vmem>>, %arg4: memref<32x32xbf16, #tpu.memory_space<vmem>>, %arg5: memref<1x32xf32, #tpu.memory_space<vmem>>, %arg6: memref<1x32xf32, #tpu.memory_space<vmem>>, %arg7: memref<1x8x32xf32, #tpu.memory_space<vmem>>) attributes {dimension_semantics = [#tpu.dimension_semantics<parallel>], iteration_bounds = array<i64: 2>, scalar_prefetch = 0 : i64, scratch_operands = 0 : i64, tpu.core_type = #tpu.core_type<tc>, window_params = [{transform_indices = @transform_0, window_bounds = array<i64: 1, 8, 32>}, {transform_indices = @transform_1, window_bounds = array<i64: 1, 1, 32>}, {pipeline_mode = #tpu.pipeline_mode<synchronous>, transform_indices = @transform_2, window_bounds = array<i64: 32, 128>}, {pipeline_mode = #tpu.pipeline_mode<synchronous>, transform_indices = @transform_3, window_bounds = array<i64: 32, 32>}, {pipeline_mode = #tpu.pipeline_mode<synchronous>, transform_indices = @transform_4, window_bounds = array<i64: 1, 32>}, {pipeline_mode = #tpu.pipeline_mode<synchronous>, transform_indices = @transform_5, window_bounds = array<i64: 1, 32>}, {transform_indices = @transform_6, window_bounds = array<i64: 1, 8, 32>}]} {
    %c0 = arith.constant 0 : index
    %c0_0 = arith.constant 0 : index
    %c0_1 = arith.constant 0 : index
    %0 = vector.load %arg1[%c0, %c0_0, %c0_1] : memref<1x8x32xf32, #tpu.memory_space<vmem>>, vector<1x8x32xf32>
    %1 = vector.shape_cast %0 : vector<1x8x32xf32> to vector<8x32xf32>
    %c0_2 = arith.constant 0 : index
    %c0_3 = arith.constant 0 : index
    %c0_4 = arith.constant 0 : index
    %2 = vector.load %arg2[%c0_2, %c0_3, %c0_4] : memref<1x1x32xf32, #tpu.memory_space<vmem>>, vector<1x1x32xf32>
    %3 = vector.shape_cast %2 : vector<1x1x32xf32> to vector<1x32xf32>
    %4 = arith.truncf %1 : vector<8x32xf32> to vector<8x32xbf16>
    %c0_5 = arith.constant 0 : index
    %c0_6 = arith.constant 0 : index
    %5 = vector.load %arg3[%c0_5, %c0_6] : memref<32x128xbf16, #tpu.memory_space<vmem>>, vector<32x128xbf16>
    %cst = arith.constant dense<0.000000e+00> : vector<8x128xf32>
    %6 = tpu.matmul %4, %5, %cst {dimension_numbers = #tpu.dot_dimension_numbers<[1], [0], [0], [1], [0, 0, 1, 1], [], []>} : vector<8x32xbf16>, vector<32x128xbf16>, vector<8x128xf32> -> vector<8x128xf32>
    %7 = vector.extract_strided_slice %6 {offsets = [0, 0], sizes = [8, 32], strides = [1, 1]} : vector<8x128xf32> to vector<8x32xf32>
    %8 = vector.broadcast %3 : vector<1x32xf32> to vector<8x32xf32>
    %9 = arith.mulf %7, %8 : vector<8x32xf32>
    %10 = vector.extract_strided_slice %6 {offsets = [0, 32], sizes = [8, 32], strides = [1, 1]} : vector<8x128xf32> to vector<8x32xf32>
    %11 = vector.extract_strided_slice %6 {offsets = [0, 64], sizes = [8, 32], strides = [1, 1]} : vector<8x128xf32> to vector<8x32xf32>
    %12 = vector.extract_strided_slice %9 {offsets = [0, 0], sizes = [8, 16], strides = [1, 1]} : vector<8x32xf32> to vector<8x16xf32>
    %13 = vector.extract_strided_slice %10 {offsets = [0, 0], sizes = [8, 16], strides = [1, 1]} : vector<8x32xf32> to vector<8x16xf32>
    %14 = vector.extract_strided_slice %11 {offsets = [0, 0], sizes = [8, 16], strides = [1, 1]} : vector<8x32xf32> to vector<8x16xf32>
    "tpu.trace_start"() <{level = 10 : i32, message = "qd,kd->qk"}> : () -> ()
    %cst_7 = arith.constant dense<0.000000e+00> : vector<8x8xf32>
    %15 = tpu.matmul %12, %13, %cst_7 {dimension_numbers = #tpu.dot_dimension_numbers<[1], [1], [0], [0], [0, 0, 1, 0], [], []>} : vector<8x16xf32>, vector<8x16xf32>, vector<8x8xf32> -> vector<8x8xf32>
    "tpu.trace_stop"() : () -> ()
    %cst_8 = arith.constant dense<0xFF800000> : vector<8xf32>
    %16 = vector.multi_reduction <maximumf>, %15, %cst_8 [1] : vector<8x8xf32> to vector<8xf32>
    %17 = vector.shape_cast %16 : vector<8xf32> to vector<8x1xf32>
    %18 = vector.broadcast %17 : vector<8x1xf32> to vector<8x8xf32>
    %19 = arith.subf %15, %18 : vector<8x8xf32>
    %20 = math.exp %19 : vector<8x8xf32>
    %cst_9 = arith.constant dense<0.000000e+00> : vector<8xf32>
    %21 = vector.multi_reduction <add>, %20, %cst_9 [1] : vector<8x8xf32> to vector<8xf32>
    %22 = vector.shape_cast %21 : vector<8xf32> to vector<8x1xf32>
    %23 = tpu.reciprocal %22 {approx = true} : vector<8x1xf32> -> vector<8x1xf32>
    %24 = vector.broadcast %23 : vector<8x1xf32> to vector<8x8xf32>
    %25 = arith.mulf %20, %24 : vector<8x8xf32>
    %cst_10 = arith.constant dense<0.000000e+00> : vector<8x16xf32>
    %26 = tpu.matmul %25, %14, %cst_10 {dimension_numbers = #tpu.dot_dimension_numbers<[1], [0], [0], [1], [0, 0, 1, 1], [], []>} : vector<8x8xf32>, vector<8x16xf32>, vector<8x16xf32> -> vector<8x16xf32>
    %27 = vector.extract_strided_slice %9 {offsets = [0, 16], sizes = [8, 16], strides = [1, 1]} : vector<8x32xf32> to vector<8x16xf32>
    %28 = vector.extract_strided_slice %10 {offsets = [0, 16], sizes = [8, 16], strides = [1, 1]} : vector<8x32xf32> to vector<8x16xf32>
    %29 = vector.extract_strided_slice %11 {offsets = [0, 16], sizes = [8, 16], strides = [1, 1]} : vector<8x32xf32> to vector<8x16xf32>
    "tpu.trace_start"() <{level = 10 : i32, message = "qd,kd->qk"}> : () -> ()
    %cst_11 = arith.constant dense<0.000000e+00> : vector<8x8xf32>
    %30 = tpu.matmul %27, %28, %cst_11 {dimension_numbers = #tpu.dot_dimension_numbers<[1], [1], [0], [0], [0, 0, 1, 0], [], []>} : vector<8x16xf32>, vector<8x16xf32>, vector<8x8xf32> -> vector<8x8xf32>
    "tpu.trace_stop"() : () -> ()
    %cst_12 = arith.constant dense<0xFF800000> : vector<8xf32>
    %31 = vector.multi_reduction <maximumf>, %30, %cst_12 [1] : vector<8x8xf32> to vector<8xf32>
    %32 = vector.shape_cast %31 : vector<8xf32> to vector<8x1xf32>
    %33 = vector.broadcast %32 : vector<8x1xf32> to vector<8x8xf32>
    %34 = arith.subf %30, %33 : vector<8x8xf32>
    %35 = math.exp %34 : vector<8x8xf32>
    %cst_13 = arith.constant dense<0.000000e+00> : vector<8xf32>
    %36 = vector.multi_reduction <add>, %35, %cst_13 [1] : vector<8x8xf32> to vector<8xf32>
    %37 = vector.shape_cast %36 : vector<8xf32> to vector<8x1xf32>
    %38 = tpu.reciprocal %37 {approx = true} : vector<8x1xf32> -> vector<8x1xf32>
    %39 = vector.broadcast %38 : vector<8x1xf32> to vector<8x8xf32>
    %40 = arith.mulf %35, %39 : vector<8x8xf32>
    %cst_14 = arith.constant dense<0.000000e+00> : vector<8x16xf32>
    %41 = tpu.matmul %40, %29, %cst_14 {dimension_numbers = #tpu.dot_dimension_numbers<[1], [0], [0], [1], [0, 0, 1, 1], [], []>} : vector<8x8xf32>, vector<8x16xf32>, vector<8x16xf32> -> vector<8x16xf32>
    %42 = tpu.concatenate %26, %41 in 1 : vector<8x16xf32>, vector<8x16xf32> -> vector<8x32xf32>
    %43 = arith.truncf %42 : vector<8x32xf32> to vector<8x32xbf16>
    %c0_15 = arith.constant 0 : index
    %c0_16 = arith.constant 0 : index
    %44 = vector.load %arg4[%c0_15, %c0_16] : memref<32x32xbf16, #tpu.memory_space<vmem>>, vector<32x32xbf16>
    %cst_17 = arith.constant dense<0.000000e+00> : vector<8x32xf32>
    %45 = tpu.matmul %43, %44, %cst_17 {dimension_numbers = #tpu.dot_dimension_numbers<[1], [0], [0], [1], [0, 0, 1, 1], [], []>} : vector<8x32xbf16>, vector<32x32xbf16>, vector<8x32xf32> -> vector<8x32xf32>
    %46 = arith.addf %45, %1 : vector<8x32xf32>
    %cst_18 = arith.constant dense<0.000000e+00> : vector<8xf32>
    %47 = vector.multi_reduction <add>, %46, %cst_18 [1] : vector<8x32xf32> to vector<8xf32>
    %48 = vector.shape_cast %47 : vector<8xf32> to vector<8x1xf32>
    %cst_19 = arith.constant 3.200000e+01 : f32
    %49 = vector.broadcast %cst_19 : f32 to vector<8x1xf32>
    %50 = arith.divf %48, %49 : vector<8x1xf32>
    %51 = vector.broadcast %50 : vector<8x1xf32> to vector<8x32xf32>
    %52 = arith.subf %46, %51 : vector<8x32xf32>
    %53 = arith.mulf %52, %52 : vector<8x32xf32>
    %cst_20 = arith.constant dense<0.000000e+00> : vector<8xf32>
    %54 = vector.multi_reduction <add>, %53, %cst_20 [1] : vector<8x32xf32> to vector<8xf32>
    %55 = vector.shape_cast %54 : vector<8xf32> to vector<8x1xf32>
    %cst_21 = arith.constant 3.200000e+01 : f32
    %56 = vector.broadcast %cst_21 : f32 to vector<8x1xf32>
    %57 = arith.divf %55, %56 : vector<8x1xf32>
    %cst_22 = arith.constant 9.99999997E-7 : f32
    %58 = vector.broadcast %cst_22 : f32 to vector<8x1xf32>
    %59 = arith.addf %57, %58 : vector<8x1xf32>
    %60 = math.rsqrt %59 : vector<8x1xf32>
    %61 = vector.broadcast %60 : vector<8x1xf32> to vector<8x32xf32>
    %62 = arith.mulf %52, %61 : vector<8x32xf32>
    %c0_23 = arith.constant 0 : index
    %c0_24 = arith.constant 0 : index
    %63 = vector.load %arg5[%c0_23, %c0_24] : memref<1x32xf32, #tpu.memory_space<vmem>>, vector<1x32xf32>
    %64 = vector.broadcast %63 : vector<1x32xf32> to vector<8x32xf32>
    %65 = arith.mulf %62, %64 : vector<8x32xf32>
    %c0_25 = arith.constant 0 : index
    %c0_26 = arith.constant 0 : index
    %66 = vector.load %arg6[%c0_25, %c0_26] : memref<1x32xf32, #tpu.memory_space<vmem>>, vector<1x32xf32>
    %67 = vector.broadcast %66 : vector<1x32xf32> to vector<8x32xf32>
    %68 = arith.addf %65, %67 : vector<8x32xf32>
    %c0_27 = arith.constant 0 : index
    %c0_28 = arith.constant 0 : index
    %c0_29 = arith.constant 0 : index
    %69 = vector.load %arg7[%c0_27, %c0_28, %c0_29] : memref<1x8x32xf32, #tpu.memory_space<vmem>>, vector<1x8x32xf32>
    %70 = vector.shape_cast %69 : vector<1x8x32xf32> to vector<8x32xf32>
    %71 = vector.shape_cast %68 : vector<8x32xf32> to vector<1x8x32xf32>
    tpu.vector_store %arg7[%c0_27, %c0_28, %c0_29], %71 {strides = array<i32>} : memref<1x8x32xf32, #tpu.memory_space<vmem>>, vector<1x8x32xf32>,
    return
  }
  func.func @transform_0(%arg0: i32) -> (i32, i32, i32) {
    %c0_i32 = arith.constant 0 : i32
    %c0_i32_0 = arith.constant 0 : i32
    %c0_i32_1 = arith.constant 0 : i32
    return %arg0, %c0_i32, %c0_i32_0 : i32, i32, i32
  }
  func.func @transform_1(%arg0: i32) -> (i32, i32, i32) {
    %c0_i32 = arith.constant 0 : i32
    %c0_i32_0 = arith.constant 0 : i32
    %c0_i32_1 = arith.constant 0 : i32
    return %arg0, %c0_i32, %c0_i32_0 : i32, i32, i32
  }
  func.func @transform_2(%arg0: i32) -> (i32, i32) {
    %c0_i32 = arith.constant 0 : i32
    %c0_i32_0 = arith.constant 0 : i32
    %c0_i32_1 = arith.constant 0 : i32
    return %c0_i32, %c0_i32_0 : i32, i32
  }
  func.func @transform_3(%arg0: i32) -> (i32, i32) {
    %c0_i32 = arith.constant 0 : i32
    %c0_i32_0 = arith.constant 0 : i32
    %c0_i32_1 = arith.constant 0 : i32
    return %c0_i32, %c0_i32_0 : i32, i32
  }
  func.func @transform_4(%arg0: i32) -> (i32, i32) {
    %c0_i32 = arith.constant 0 : i32
    %c0_i32_0 = arith.constant 0 : i32
    %c0_i32_1 = arith.constant 0 : i32
    return %c0_i32, %c0_i32_0 : i32, i32
  }
  func.func @transform_5(%arg0: i32) -> (i32, i32) {
    %c0_i32 = arith.constant 0 : i32
    %c0_i32_0 = arith.constant 0 : i32
    %c0_i32_1 = arith.constant 0 : i32
    return %c0_i32, %c0_i32_0 : i32, i32
  }
  func.func @transform_6(%arg0: i32) -> (i32, i32, i32) {
    %c0_i32 = arith.constant 0 : i32
    %c0_i32_0 = arith.constant 0 : i32
    %c0_i32_1 = arith.constant 0 : i32
    return %arg0, %c0_i32, %c0_i32_0 : i32, i32, i32
  }
}

</mosaic_0001>

<llo_original>
// kernel: meta_transformer_layer.1
$region0: #{meta_transformer_layer.1}
  #allocation0 [shape = 'u32[]', space=smem, size = 0x4, offset = 0x4, fixed_abs, tag = 'smem constant byte address 0x4 - core index']
  #allocation1 [shape = 'u32[144,128]{1,0:T(1,128)}', space=vmem, size = 0x12000, scoped, tag = 'internal scratch']
  %s0 = inlined_call_operand.vmem [shape: f32[2,8,32], index: 0, kind: input, shape index: {}]
  %s1 = inlined_call_operand.vmem [shape: f32[2,1,32], index: 1, kind: input, shape index: {}]
  %s2 = inlined_call_operand.vmem [shape: bf16[32,128], index: 2, kind: input, shape index: {}]
  %s3 = inlined_call_operand.vmem [shape: bf16[32,32], index: 3, kind: input, shape index: {}]
  %s4 = inlined_call_operand.vmem [shape: f32[1,32], index: 4, kind: input, shape index: {}]
  %s5 = inlined_call_operand.vmem [shape: f32[1,32], index: 5, kind: input, shape index: {}]
  %s6 = inlined_call_operand.hbm [shape: f32[2,8,32], index: 6, kind: output, shape index: {}]
  %s7 = sld [smem:[#allocation0]]
  $region57: #{meta_transformer_layer.1} parent=0
    _
  %s9 = ssub.s32 1, %s7
  %s10 = scalar_select 0, %s9, %s7
  $region1: #{meta_transformer_layer.1} parent=0
    #allocation2 [shape = 'u8[8192]{0}', space=vmem, size = 0x2000, scoped, tag = 'output window, operand 0']
    #allocation3 [shape = 's32[2]{0}', space=sflag, size = 0x8, scoped, tag = 'scoped memory for meta_transformer_layer.1']
    %11 = vsyncpa [#allocation3], 0
    %s12 = scalar_lea.sflag [#allocation3], 1
    %13 = vsyncpa %s12, 0
    loop: start=0, step=1, limit=4
    $region2: #{meta_transformer_layer.1} parent=1 // loop_pre_header
      _
    $region3: #{meta_transformer_layer.1} parent=1 // loop_header
      %s15 = sphi 0, %s19
      %p16 = scmp.ge.s32.totalorder %s15, 4
      %s25 = sphi 0, %s27
      %s28 = sphi 0, %s25
      %s29 = sphi 0, %s28
      %s45 = sphi 0, %s29
      %s51 = sphi 0, %s53
      %s54 = sphi 0, %s51
      %s55 = sphi 0, %s54
      %s71 = sphi 0, %s55
      %s75 = sphi 0, %s75
      %s77 = sphi 0, %s75
      %s78 = sphi 0, %s77
      %s92 = sphi 0, %s78
      %s96 = sphi 0, %s96
      %s98 = sphi 0, %s96
      %s99 = sphi 0, %s98
      %s113 = sphi 0, %s99
      %s117 = sphi 0, %s117
      %s119 = sphi 0, %s117
      %s120 = sphi 0, %s119
      %s134 = sphi 0, %s120
      %s138 = sphi 0, %s138
      %s140 = sphi 0, %s138
      %s141 = sphi 0, %s140
      %s155 = sphi 0, %s141
      %s161 = sphi 0, %s163
      %s164 = sphi 0, %s161
      %s165 = sphi 0, %s164
      %s181 = sphi 0, %s165
    $region4: #{meta_transformer_layer.1} parent=1 // loop_header_branch
      %18 = sbr.rel (%p16) target = $region8
    $region5: #{meta_transformer_layer.1} parent=1 // loop_body
      %s20 = ssub.s32 %s15, 1
      %s21 = ssub.s32 %s15, 2
      %s22 = sadd.s32 %s15, 1
      %s23 = ssub.s32 %s15, %s22
      %p24 = scmp.eq.s32.totalorder %s23, 0
      %s26 = sadd.s32 %s25, 1
      %s27 = scalar_select %p24, %s25, %s26
      %p30 = pneg %p24
      %p31 = scmp.eq.s32.totalorder %s15, 1
      %p32 = por %p30, %p31
      %p33 = scmp.ne.s32.totalorder %s25, %s28
      %p34 = scmp.eq.s32.totalorder %s15, 0
      %p35 = por %p33, %p34
      %p36 = scmp.ne.s32.totalorder %s25, %s28
      %p37 = scmp.eq.s32.totalorder %s20, 1
      %p38 = por %p36, %p37
      %p39 = scmp.ne.s32.totalorder %s28, %s29
      %p40 = scmp.eq.s32.totalorder %s20, 0
      %p41 = por %p39, %p40
      %p42 = scmp.ne.s32.totalorder %s28, %s29
      %p43 = scmp.eq.s32.totalorder %s21, 1
      %p44 = por %p42, %p43
      %p46 = scmp.ne.s32.totalorder %s29, %s45
      %p47 = scmp.eq.s32.totalorder %s21, 0
      %p48 = por %p46, %p47
      %s49 = ssub.s32 %s15, %s22
      %p50 = scmp.eq.s32.totalorder %s49, 0
      %s52 = sadd.s32 %s51, 1
      %s53 = scalar_select %p50, %s51, %s52
      %p56 = pneg %p50
      %p57 = scmp.eq.s32.totalorder %s15, 1
      %p58 = por %p56, %p57
      %p59 = scmp.ne.s32.totalorder %s51, %s54
      %p60 = scmp.eq.s32.totalorder %s15, 0
      %p61 = por %p59, %p60
      %p62 = scmp.ne.s32.totalorder %s51, %s54
      %p63 = scmp.eq.s32.totalorder %s20, 1
      %p64 = por %p62, %p63
      %p65 = scmp.ne.s32.totalorder %s54, %s55
      %p66 = scmp.eq.s32.totalorder %s20, 0
      %p67 = por %p65, %p66
      %p68 = scmp.ne.s32.totalorder %s54, %s55
      %p69 = scmp.eq.s32.totalorder %s21, 1
      %p70 = por %p68, %p69
      %p72 = scmp.ne.s32.totalorder %s55, %s71
      %p73 = scmp.eq.s32.totalorder %s21, 0
      %p74 = por %p72, %p73
      %s76 = sadd.s32 %s75, 1
      %p79 = scmp.eq.s32.totalorder %s15, 1
      %p80 = scmp.ne.s32.totalorder %s75, %s77
      %p81 = scmp.eq.s32.totalorder %s15, 0
      %p82 = por %p80, %p81
      %p83 = scmp.ne.s32.totalorder %s75, %s77
      %p84 = scmp.eq.s32.totalorder %s20, 1
      %p85 = por %p83, %p84
      %p86 = scmp.ne.s32.totalorder %s77, %s78
      %p87 = scmp.eq.s32.totalorder %s20, 0
      %p88 = por %p86, %p87
      %p89 = scmp.ne.s32.totalorder %s77, %s78
      %p90 = scmp.eq.s32.totalorder %s21, 1
      %p91 = por %p89, %p90
      %p93 = scmp.ne.s32.totalorder %s78, %s92
      %p94 = scmp.eq.s32.totalorder %s21, 0
      %p95 = por %p93, %p94
      %s97 = sadd.s32 %s96, 1
      %p100 = scmp.eq.s32.totalorder %s15, 1
      %p101 = scmp.ne.s32.totalorder %s96, %s98
      %p102 = scmp.eq.s32.totalorder %s15, 0
      %p103 = por %p101, %p102
      %p104 = scmp.ne.s32.totalorder %s96, %s98
      %p105 = scmp.eq.s32.totalorder %s20, 1
      %p106 = por %p104, %p105
      %p107 = scmp.ne.s32.totalorder %s98, %s99
      %p108 = scmp.eq.s32.totalorder %s20, 0
      %p109 = por %p107, %p108
      %p110 = scmp.ne.s32.totalorder %s98, %s99
      %p111 = scmp.eq.s32.totalorder %s21, 1
      %p112 = por %p110, %p111
      %p114 = scmp.ne.s32.totalorder %s99, %s113
      %p115 = scmp.eq.s32.totalorder %s21, 0
      %p116 = por %p114, %p115
      %s118 = sadd.s32 %s117, 1
      %p121 = scmp.eq.s32.totalorder %s15, 1
      %p122 = scmp.ne.s32.totalorder %s117, %s119
      %p123 = scmp.eq.s32.totalorder %s15, 0
      %p124 = por %p122, %p123
      %p125 = scmp.ne.s32.totalorder %s117, %s119
      %p126 = scmp.eq.s32.totalorder %s20, 1
      %p127 = por %p125, %p126
      %p128 = scmp.ne.s32.totalorder %s119, %s120
      %p129 = scmp.eq.s32.totalorder %s20, 0
      %p130 = por %p128, %p129
      %p131 = scmp.ne.s32.totalorder %s119, %s120
      %p132 = scmp.eq.s32.totalorder %s21, 1
      %p133 = por %p131, %p132
      %p135 = scmp.ne.s32.totalorder %s120, %s134
      %p136 = scmp.eq.s32.totalorder %s21, 0
      %p137 = por %p135, %p136
      %s139 = sadd.s32 %s138, 1
      %p142 = scmp.eq.s32.totalorder %s15, 1
      %p143 = scmp.ne.s32.totalorder %s138, %s140
      %p144 = scmp.eq.s32.totalorder %s15, 0
      %p145 = por %p143, %p144
      %p146 = scmp.ne.s32.totalorder %s138, %s140
      %p147 = scmp.eq.s32.totalorder %s20, 1
      %p148 = por %p146, %p147
      %p149 = scmp.ne.s32.totalorder %s140, %s141
      %p150 = scmp.eq.s32.totalorder %s20, 0
      %p151 = por %p149, %p150
      %p152 = scmp.ne.s32.totalorder %s140, %s141
      %p153 = scmp.eq.s32.totalorder %s21, 1
      %p154 = por %p152, %p153
      %p156 = scmp.ne.s32.totalorder %s141, %s155
      %p157 = scmp.eq.s32.totalorder %s21, 0
      %p158 = por %p156, %p157
      %s159 = ssub.s32 %s15, %s22
      %p160 = scmp.eq.s32.totalorder %s159, 0
      %s162 = sadd.s32 %s161, 1
      %s163 = scalar_select %p160, %s161, %s162
      %p166 = pneg %p160
      %p167 = scmp.eq.s32.totalorder %s15, 1
      %p168 = por %p166, %p167
      %p169 = scmp.ne.s32.totalorder %s161, %s164
      %p170 = scmp.eq.s32.totalorder %s15, 0
      %p171 = por %p169, %p170
      %p172 = scmp.ne.s32.totalorder %s161, %s164
      %p173 = scmp.eq.s32.totalorder %s20, 1
      %p174 = por %p172, %p173
      %p175 = scmp.ne.s32.totalorder %s164, %s165
      %p176 = scmp.eq.s32.totalorder %s20, 0
      %p177 = por %p175, %p176
      %p178 = scmp.ne.s32.totalorder %s164, %s165
      %p179 = scmp.eq.s32.totalorder %s21, 1
      %p180 = por %p178, %p179
      %p182 = scmp.ne.s32.totalorder %s165, %s181
      %p183 = scmp.eq.s32.totalorder %s21, 0
      %p184 = por %p182, %p183
      %p185 = scmp.le.s32.totalorder 1, %s15
      %p186 = scmp.lt.s32.totalorder %s15, 3
      %p187 = pnand %p185, %p186
      %p188 = pneg %p187
      // Predicated region
      $region9: #{meta_transformer_layer.1} parent=5 // pred_check
        _
      $region10: #{meta_transformer_layer.1} parent=5 // pred_check_branch
        %190 = sbr.rel (%p187) target = $region12
      $region11: #{meta_transformer_layer.1} parent=5 // pred_region
        %s191 = ssub.s32 %s15, 1
        // Predicated region
        $region13: #{meta_transformer_layer.1} parent=11 // pred_check
          %p192 = pneg %p88
        $region14: #{meta_transformer_layer.1} parent=11 // pred_check_branch
          %194 = sbr.rel (%p192) target = $region16
        $region15: #{meta_transformer_layer.1} parent=11 // pred_region
          _
        $region16: #{meta_transformer_layer.1} parent=11 // pred_fallthru
          _
        // Predicated region
        $region17: #{meta_transformer_layer.1} parent=11 // pred_check
          %p195 = pneg %p109
        $region18: #{meta_transformer_layer.1} parent=11 // pred_check_branch
          %197 = sbr.rel (%p195) target = $region20
        $region19: #{meta_transformer_layer.1} parent=11 // pred_region
          _
        $region20: #{meta_transformer_layer.1} parent=11 // pred_fallthru
          _
        // Predicated region
        $region21: #{meta_transformer_layer.1} parent=11 // pred_check
          %p198 = pneg %p130
        $region22: #{meta_transformer_layer.1} parent=11 // pred_check_branch
          %200 = sbr.rel (%p198) target = $region24
        $region23: #{meta_transformer_layer.1} parent=11 // pred_region
          _
        $region24: #{meta_transformer_layer.1} parent=11 // pred_fallthru
          _
        // Predicated region
        $region25: #{meta_transformer_layer.1} parent=11 // pred_check
          %p201 = pneg %p151
        $region26: #{meta_transformer_layer.1} parent=11 // pred_check_branch
          %203 = sbr.rel (%p201) target = $region28
        $region27: #{meta_transformer_layer.1} parent=11 // pred_region
          _
        $region28: #{meta_transformer_layer.1} parent=11 // pred_fallthru
          _
      $region12: #{meta_transformer_layer.1} parent=5 // pred_fallthru
        _
      %p204 = scmp.lt.s32.totalorder %s15, 2
      // Predicated region
      $region29: #{meta_transformer_layer.1} parent=5 // pred_check
        %p205 = pneg %p204
      $region30: #{meta_transformer_layer.1} parent=5 // pred_check_branch
        %207 = sbr.rel (%p205) target = $region32
      $region31: #{meta_transformer_layer.1} parent=5 // pred_region
        // Predicated region
        $region33: #{meta_transformer_layer.1} parent=31 // pred_check
          %p208 = pneg %p35
        $region34: #{meta_transformer_layer.1} parent=31 // pred_check_branch
          %210 = sbr.rel (%p208) target = $region36
        $region35: #{meta_transformer_layer.1} parent=31 // pred_region
          %p211 = scmp.lt.s32.totalorder %s15, 1
          %s212 = scalar_select %p211, %s15, 1
          %s213 = smul.addr %s212, 8
          %s214 = scalar_lea.vmem %s0, %s213
        $region36: #{meta_transformer_layer.1} parent=31 // pred_fallthru
          _
        // Predicated region
        $region37: #{meta_transformer_layer.1} parent=31 // pred_check
          %p215 = pneg %p61
        $region38: #{meta_transformer_layer.1} parent=31 // pred_check_branch
          %217 = sbr.rel (%p215) target = $region40
        $region39: #{meta_transformer_layer.1} parent=31 // pred_region
          %p218 = scmp.lt.s32.totalorder %s15, 1
          %s219 = scalar_select %p218, %s15, 1
          %s220 = scalar_lea.vmem %s1, %s219
        $region40: #{meta_transformer_layer.1} parent=31 // pred_fallthru
          _
      $region32: #{meta_transformer_layer.1} parent=5 // pred_fallthru
        _
      %p221 = scmp.le.s32.totalorder 1, %s15
      %p222 = scmp.lt.s32.totalorder %s15, 3
      %p223 = pnand %p221, %p222
      %p224 = pneg %p223
      // Predicated region
      $region41: #{meta_transformer_layer.1} parent=5 // pred_check
        _
      $region42: #{meta_transformer_layer.1} parent=5 // pred_check_branch
        %226 = sbr.rel (%p223) target = $region44
      $region43: #{meta_transformer_layer.1} parent=5 // pred_region
        %s227 = ssub.s32 %s15, 1
        %p228 = scmp.lt.s32.totalorder %s20, 1
        %s229 = scalar_select %p228, %s20, 1
        %s230 = smul.addr %s229, 8
        %s231 = scalar_lea.vmem %s0, %s230
        %p232 = pneg %p41
        %p233 = pneg %p38
        %p234 = scmp.lt.s32.totalorder %s20, 1
        %s235 = scalar_select %p234, %s20, 1
        %s236 = scalar_lea.vmem %s1, %s235
        %p237 = pneg %p67
        %p238 = pneg %p64
        %p239 = pneg %p88
        %p240 = pneg %p85
        %p241 = pneg %p109
        %p242 = pneg %p106
        %p243 = pneg %p130
        %p244 = pneg %p127
        %p245 = pneg %p151
        %p246 = pneg %p148
        %p247 = pneg %p177
        %p248 = pneg %p174
        %s249 = sand.u32 %s164, 1
        %s250 = scalar_lea.sflag [#allocation3], %s249
        %s251 = sand.u32 %s164, 1
        %s252 = smul.addr %s251, 8
        %s253 = scalar_lea.vmem [#allocation2], %s252
        %p254 = scmp.lt.s32.totalorder %s20, 1
        %s255 = scalar_select %p254, %s20, 1
        %s256 = smul.addr %s255, 8
        %s257 = scalar_lea.vmem %s0, %s256
        %p258 = scmp.lt.s32.totalorder %s20, 1
        %s259 = scalar_select %p258, %s20, 1
        %s260 = scalar_lea.vmem %s1, %s259
        %v262 = vld [vmem:[%s257] sm:$0xff]
        %v263 = vld [vmem:[%s260] sm:$0x1]
        %v264 = vpack.c.bf16 %v262, %v262
        %v265 = vld [vmem:[%s2] sm:$0xf]
        %v266 = vld [vmem:[%s2 + $0x4] sm:$0xf]
        %v267 = vld [vmem:[%s2 + $0x8] sm:$0xf]
        %v268 = vld [vmem:[%s2 + $0xc] sm:$0xf]
        %v273 = vunpack.c.l.b16 %v265
        %v274 = vunpack.c.l.b16 %v266
        %v275 = vunpack.c.l.b16 %v267
        %v276 = vunpack.c.l.b16 %v268
        %v277 = vpack.c.b16 %v274, %v273
        %v278 = vpack.c.b16 %v276, %v275
        %vm281 = vcmask 261120
        %v283 = vsel %vm281, %v264, 0
        %285 = vmatprep.subr.bf16.mxu0 0
        %286 = vmatpush1.bf16.msra.mxu0 0
        %287 = vmatprep.subr.bf16.mxu0 0
        %288 = vmatpush1.bf16.msra.mxu0 0
        %289 = vmatprep.subr.bf16.mxu0 0
        %290 = vmatpush1.bf16.msra.mxu0 0
        %291 = vmatprep.subr.bf16.mxu0 0
        %292 = vmatpush1.bf16.msra.mxu0 0
        %293 = vmatprep.subr.bf16.mxu0 0
        %294 = vmatpush1.bf16.msra.mxu0 0
        %295 = vmatprep.subr.bf16.mxu0 0
        %296 = vmatpush1.bf16.msra.mxu0 0
        %297 = vmatprep.subr.bf16.mxu0 0
        %298 = vmatpush1.bf16.msra.mxu0 %v278
        %299 = vmatprep.subr.bf16.mxu0 0
        %300 = vmatpush1.bf16.msra.mxu0 %v277
        %301 = vmatprep.subr.bf16.mxu0 0
        %302 = vmatpush2.bf16.msra.mxu0 0
        %303 = vmatprep.subr.bf16.mxu0 0
        %304 = vmatpush2.bf16.msra.mxu0 0
        %305 = vmatprep.subr.bf16.mxu0 0
        %306 = vmatpush2.bf16.msra.mxu0 0
        %307 = vmatprep.subr.bf16.mxu0 0
        %308 = vmatpush2.bf16.msra.mxu0 0
        %309 = vmatprep.subr.bf16.mxu0 0
        %310 = vmatpush2.bf16.msra.mxu0 0
        %311 = vmatprep.subr.bf16.mxu0 0
        %312 = vmatpush2.bf16.msra.mxu0 0
        %313 = vmatprep.subr.bf16.mxu0 0
        %314 = vmatpush2.bf16.msra.mxu0 0
        %315 = vmatprep.subr.bf16.mxu0 0
        %316 = vmatpush2.bf16.msra.mxu0 0
        %317 = vmatprep.mubr.bf16.mxu0 0
        %318 = vmatmul.mubr.bf16.gmra.mxu0 %v283
        %v319 = vpop.f32.mrf.mxu0
        %v320 = vadd.f32 0.0, %v319
        %v321 = vpop.f32.mrf.mxu0
        %v322 = vpop.f32.mrf.mxu0
        %v323 = vpop.f32.mrf.mxu0
        %324 = vdwg.mxu0
        %v326 = vlaneseq
        %v327 = vshrl.u32 %v326, 7
        %v328 = vsub.s32 0, %v327
        %v329 = vrot.slane %v263, %v328
        %v331 = vmul.f32 %v320, %v329
        %333 = vrot.lane.b32.xlu0 %v320, 96
        %v334 = vpop.permute.xlu0 %333
        %vm335 = vcmask 130048
        %v337 = vsel %vm335, %v331, 0
        %v339 = vsel %vm335, %v334, 0
        %341 = vmatprep.subr.mxu0 0.0
        %342 = vmatpush1.xpose.msra.mxu0 0.0
        %343 = vmatprep.subr.mxu0 0.0
        %344 = vmatpush1.xpose.msra.mxu0 0.0
        %345 = vmatprep.subr.mxu0 0.0
        %346 = vmatpush1.xpose.msra.mxu0 0.0
        %347 = vmatprep.subr.mxu0 0.0
        %348 = vmatpush1.xpose.msra.mxu0 0.0
        %349 = vmatprep.subr.mxu0 0.0
        %350 = vmatpush1.xpose.msra.mxu0 0.0
        %351 = vmatprep.subr.mxu0 0.0
        %352 = vmatpush1.xpose.msra.mxu0 0.0
        %353 = vmatprep.subr.mxu0 0.0
        %354 = vmatpush1.xpose.msra.mxu0 0.0
        %355 = vmatprep.subr.mxu0 0.0
        %356 = vmatpush1.xpose.msra.mxu0 0.0
        %357 = vmatprep.subr.mxu0 0.0
        %358 = vmatpush1.xpose.msra.mxu0 0.0
        %359 = vmatprep.subr.mxu0 0.0
        %360 = vmatpush1.xpose.msra.mxu0 0.0
        %361 = vmatprep.subr.mxu0 0.0
        %362 = vmatpush1.xpose.msra.mxu0 0.0
        %363 = vmatprep.subr.mxu0 0.0
        %364 = vmatpush1.xpose.msra.mxu0 0.0
        %365 = vmatprep.subr.mxu0 0.0
        %366 = vmatpush1.xpose.msra.mxu0 0.0
        %367 = vmatprep.subr.mxu0 0.0
        %368 = vmatpush1.xpose.msra.mxu0 0.0
        %369 = vmatprep.subr.mxu0 0.0
        %370 = vmatpush1.xpose.msra.mxu0 0.0
        %371 = vmatprep.subr.mxu0 0.0
        %372 = vmatpush1.xpose.msra.mxu0 %v339
        %373 = vmatprep.subr.mxu0 0.0
        %374 = vmatpush2.xpose.msra.mxu0 0.0
        %375 = vmatprep.subr.mxu0 0.0
        %376 = vmatpush2.xpose.msra.mxu0 0.0
        %377 = vmatprep.subr.mxu0 0.0
        %378 = vmatpush2.xpose.msra.mxu0 0.0
        %379 = vmatprep.subr.mxu0 0.0
        %380 = vmatpush2.xpose.msra.mxu0 0.0
        %381 = vmatprep.subr.mxu0 0.0
        %382 = vmatpush2.xpose.msra.mxu0 0.0
        %383 = vmatprep.subr.mxu0 0.0
        %384 = vmatpush2.xpose.msra.mxu0 0.0
        %385 = vmatprep.subr.mxu0 0.0
        %386 = vmatpush2.xpose.msra.mxu0 0.0
        %387 = vmatprep.subr.mxu0 0.0
        %388 = vmatpush2.xpose.msra.mxu0 0.0
        %389 = vmatprep.subr.mxu0 0.0
        %390 = vmatpush2.xpose.msra.mxu0 0.0
        %391 = vmatprep.subr.mxu0 0.0
        %392 = vmatpush2.xpose.msra.mxu0 0.0
        %393 = vmatprep.subr.mxu0 0.0
        %394 = vmatpush2.xpose.msra.mxu0 0.0
        %395 = vmatprep.subr.mxu0 0.0
        %396 = vmatpush2.xpose.msra.mxu0 0.0
        %397 = vmatprep.subr.mxu0 0.0
        %398 = vmatpush2.xpose.msra.mxu0 0.0
        %399 = vmatprep.subr.mxu0 0.0
        %400 = vmatpush2.xpose.msra.mxu0 0.0
        %401 = vmatprep.subr.mxu0 0.0
        %402 = vmatpush2.xpose.msra.mxu0 0.0
        %403 = vmatprep.subr.mxu0 0.0
        %404 = vmatpush2.xpose.msra.mxu0 0.0
        %405 = vmatprep.mubr.f32.mxu0 0.0
        %406 = vmatmul.mubr.f32.gmra.mxu0 %v337
        %v407 = vpop.f32.mrf.mxu0
        %v408 = vadd.f32 0.0, %v407
        %v409 = vpop.f32.mrf.mxu0
        %410 = vdwg.mxu0
        %vm411 = vcmask 64512
        %v412 = vsel %vm411, %v408, -inf
        %413 = vmax.xlane.f32.xlu0 %v412
        %v414 = vpop.xlane.xlu0 %413
        %v415 = vsub.f32 %v408, %v414
        %v416 = vmul.f32 %v415, 1.442695
        %v417 = vpow.pop %v416
        %v418 = vsel %vm411, %v417, 0.0
        %419 = vadd.xlane.f32.xlu0 %v418
        %v420 = vpop.xlane.xlu0 %419
        %v421 = vrcp.pop %v420
        %v422 = vmul.f32 %v417, %v421
        %423 = vrot.lane.b32.xlu0 %v320, 64
        %v424 = vpop.permute.xlu0 %423
        %v427 = vsel %vm411, %v422, 0
        %429 = vmatprep.subr.mxu0 0.0
        %430 = vmatpush1.msra.mxu0 0.0
        %431 = vmatprep.subr.mxu0 0.0
        %432 = vmatpush1.msra.mxu0 0.0
        %433 = vmatprep.subr.mxu0 0.0
        %434 = vmatpush1.msra.mxu0 0.0
        %435 = vmatprep.subr.mxu0 0.0
        %436 = vmatpush1.msra.mxu0 0.0
        %437 = vmatprep.subr.mxu0 0.0
        %438 = vmatpush1.msra.mxu0 0.0
        %439 = vmatprep.subr.mxu0 0.0
        %440 = vmatpush1.msra.mxu0 0.0
        %441 = vmatprep.subr.mxu0 0.0
        %442 = vmatpush1.msra.mxu0 0.0
        %443 = vmatprep.subr.mxu0 0.0
        %444 = vmatpush1.msra.mxu0 0.0
        %445 = vmatprep.subr.mxu0 0.0
        %446 = vmatpush1.msra.mxu0 0.0
        %447 = vmatprep.subr.mxu0 0.0
        %448 = vmatpush1.msra.mxu0 0.0
        %449 = vmatprep.subr.mxu0 0.0
        %450 = vmatpush1.msra.mxu0 0.0
        %451 = vmatprep.subr.mxu0 0.0
        %452 = vmatpush1.msra.mxu0 0.0
        %453 = vmatprep.subr.mxu0 0.0
        %454 = vmatpush1.msra.mxu0 0.0
        %455 = vmatprep.subr.mxu0 0.0
        %456 = vmatpush1.msra.mxu0 0.0
        %457 = vmatprep.subr.mxu0 0.0
        %458 = vmatpush1.msra.mxu0 0.0
        %459 = vmatprep.subr.mxu0 0.0
        %460 = vmatpush1.msra.mxu0 %v424
        %461 = vmatprep.subr.mxu0 0.0
        %462 = vmatpush2.msra.mxu0 0.0
        %463 = vmatprep.subr.mxu0 0.0
        %464 = vmatpush2.msra.mxu0 0.0
        %465 = vmatprep.subr.mxu0 0.0
        %466 = vmatpush2.msra.mxu0 0.0
        %467 = vmatprep.subr.mxu0 0.0
        %468 = vmatpush2.msra.mxu0 0.0
        %469 = vmatprep.subr.mxu0 0.0
        %470 = vmatpush2.msra.mxu0 0.0
        %471 = vmatprep.subr.mxu0 0.0
        %472 = vmatpush2.msra.mxu0 0.0
        %473 = vmatprep.subr.mxu0 0.0
        %474 = vmatpush2.msra.mxu0 0.0
        %475 = vmatprep.subr.mxu0 0.0
        %476 = vmatpush2.msra.mxu0 0.0
        %477 = vmatprep.subr.mxu0 0.0
        %478 = vmatpush2.msra.mxu0 0.0
        %479 = vmatprep.subr.mxu0 0.0
        %480 = vmatpush2.msra.mxu0 0.0
        %481 = vmatprep.subr.mxu0 0.0
        %482 = vmatpush2.msra.mxu0 0.0
        %483 = vmatprep.subr.mxu0 0.0
        %484 = vmatpush2.msra.mxu0 0.0
        %485 = vmatprep.subr.mxu0 0.0
        %486 = vmatpush2.msra.mxu0 0.0
        %487 = vmatprep.subr.mxu0 0.0
        %488 = vmatpush2.msra.mxu0 0.0
        %489 = vmatprep.subr.mxu0 0.0
        %490 = vmatpush2.msra.mxu0 0.0
        %491 = vmatprep.subr.mxu0 0.0
        %492 = vmatpush2.msra.mxu0 0.0
        %493 = vmatprep.mubr.f32.mxu0 0.0
        %494 = vmatmul.mubr.f32.gmra.mxu0 %v427
        %v495 = vpop.f32.mrf.mxu0
        %v496 = vadd.f32 0.0, %v495
        %v497 = vpop.f32.mrf.mxu0
        %498 = vdwg.mxu0
        %499 = vrot.lane.b32.xlu0 %v331, 112
        %v500 = vpop.permute.xlu0 %499
        %501 = vrot.lane.b32.xlu0 %v320, 80
        %v502 = vpop.permute.xlu0 %501
        %v503 = vsel %vm335, %v500, 0
        %v505 = vsel %vm335, %v502, 0
        %507 = vmatprep.subr.mxu0 0.0
        %508 = vmatpush1.xpose.msra.mxu0 0.0
        %509 = vmatprep.subr.mxu0 0.0
        %510 = vmatpush1.xpose.msra.mxu0 0.0
        %511 = vmatprep.subr.mxu0 0.0
        %512 = vmatpush1.xpose.msra.mxu0 0.0
        %513 = vmatprep.subr.mxu0 0.0
        %514 = vmatpush1.xpose.msra.mxu0 0.0
        %515 = vmatprep.subr.mxu0 0.0
        %516 = vmatpush1.xpose.msra.mxu0 0.0
        %517 = vmatprep.subr.mxu0 0.0
        %518 = vmatpush1.xpose.msra.mxu0 0.0
        %519 = vmatprep.subr.mxu0 0.0
        %520 = vmatpush1.xpose.msra.mxu0 0.0
        %521 = vmatprep.subr.mxu0 0.0
        %522 = vmatpush1.xpose.msra.mxu0 0.0
        %523 = vmatprep.subr.mxu0 0.0
        %524 = vmatpush1.xpose.msra.mxu0 0.0
        %525 = vmatprep.subr.mxu0 0.0
        %526 = vmatpush1.xpose.msra.mxu0 0.0
        %527 = vmatprep.subr.mxu0 0.0
        %528 = vmatpush1.xpose.msra.mxu0 0.0
        %529 = vmatprep.subr.mxu0 0.0
        %530 = vmatpush1.xpose.msra.mxu0 0.0
        %531 = vmatprep.subr.mxu0 0.0
        %532 = vmatpush1.xpose.msra.mxu0 0.0
        %533 = vmatprep.subr.mxu0 0.0
        %534 = vmatpush1.xpose.msra.mxu0 0.0
        %535 = vmatprep.subr.mxu0 0.0
        %536 = vmatpush1.xpose.msra.mxu0 0.0
        %537 = vmatprep.subr.mxu0 0.0
        %538 = vmatpush1.xpose.msra.mxu0 %v505
        %539 = vmatprep.subr.mxu0 0.0
        %540 = vmatpush2.xpose.msra.mxu0 0.0
        %541 = vmatprep.subr.mxu0 0.0
        %542 = vmatpush2.xpose.msra.mxu0 0.0
        %543 = vmatprep.subr.mxu0 0.0
        %544 = vmatpush2.xpose.msra.mxu0 0.0
        %545 = vmatprep.subr.mxu0 0.0
        %546 = vmatpush2.xpose.msra.mxu0 0.0
        %547 = vmatprep.subr.mxu0 0.0
        %548 = vmatpush2.xpose.msra.mxu0 0.0
        %549 = vmatprep.subr.mxu0 0.0
        %550 = vmatpush2.xpose.msra.mxu0 0.0
        %551 = vmatprep.subr.mxu0 0.0
        %552 = vmatpush2.xpose.msra.mxu0 0.0
        %553 = vmatprep.subr.mxu0 0.0
        %554 = vmatpush2.xpose.msra.mxu0 0.0
        %555 = vmatprep.subr.mxu0 0.0
        %556 = vmatpush2.xpose.msra.mxu0 0.0
        %557 = vmatprep.subr.mxu0 0.0
        %558 = vmatpush2.xpose.msra.mxu0 0.0
        %559 = vmatprep.subr.mxu0 0.0
        %560 = vmatpush2.xpose.msra.mxu0 0.0
        %561 = vmatprep.subr.mxu0 0.0
        %562 = vmatpush2.xpose.msra.mxu0 0.0
        %563 = vmatprep.subr.mxu0 0.0
        %564 = vmatpush2.xpose.msra.mxu0 0.0
        %565 = vmatprep.subr.mxu0 0.0
        %566 = vmatpush2.xpose.msra.mxu0 0.0
        %567 = vmatprep.subr.mxu0 0.0
        %568 = vmatpush2.xpose.msra.mxu0 0.0
        %569 = vmatprep.subr.mxu0 0.0
        %570 = vmatpush2.xpose.msra.mxu0 0.0
        %571 = vmatprep.mubr.f32.mxu0 0.0
        %572 = vmatmul.mubr.f32.gmra.mxu0 %v503
        %v573 = vpop.f32.mrf.mxu0
        %v574 = vadd.f32 0.0, %v573
        %v575 = vpop.f32.mrf.mxu0
        %576 = vdwg.mxu0
        %v577 = vsel %vm411, %v574, -inf
        %578 = vmax.xlane.f32.xlu0 %v577
        %v579 = vpop.xlane.xlu0 %578
        %v580 = vsub.f32 %v574, %v579
        %v581 = vmul.f32 %v580, 1.442695
        %v582 = vpow.pop %v581
        %v583 = vsel %vm411, %v582, 0.0
        %584 = vadd.xlane.f32.xlu0 %v583
        %v585 = vpop.xlane.xlu0 %584
        %v586 = vrcp.pop %v585
        %v587 = vmul.f32 %v582, %v586
        %588 = vrot.lane.b32.xlu0 %v320, 48
        %v589 = vpop.permute.xlu0 %588
        %v592 = vsel %vm411, %v587, 0
        %594 = vmatprep.subr.mxu0 0.0
        %595 = vmatpush1.msra.mxu0 0.0
        %596 = vmatprep.subr.mxu0 0.0
        %597 = vmatpush1.msra.mxu0 0.0
        %598 = vmatprep.subr.mxu0 0.0
        %599 = vmatpush1.msra.mxu0 0.0
        %600 = vmatprep.subr.mxu0 0.0
        %601 = vmatpush1.msra.mxu0 0.0
        %602 = vmatprep.subr.mxu0 0.0
        %603 = vmatpush1.msra.mxu0 0.0
        %604 = vmatprep.subr.mxu0 0.0
        %605 = vmatpush1.msra.mxu0 0.0
        %606 = vmatprep.subr.mxu0 0.0
        %607 = vmatpush1.msra.mxu0 0.0
        %608 = vmatprep.subr.mxu0 0.0
        %609 = vmatpush1.msra.mxu0 0.0
        %610 = vmatprep.subr.mxu0 0.0
        %611 = vmatpush1.msra.mxu0 0.0
        %612 = vmatprep.subr.mxu0 0.0
        %613 = vmatpush1.msra.mxu0 0.0
        %614 = vmatprep.subr.mxu0 0.0
        %615 = vmatpush1.msra.mxu0 0.0
        %616 = vmatprep.subr.mxu0 0.0
        %617 = vmatpush1.msra.mxu0 0.0
        %618 = vmatprep.subr.mxu0 0.0
        %619 = vmatpush1.msra.mxu0 0.0
        %620 = vmatprep.subr.mxu0 0.0
        %621 = vmatpush1.msra.mxu0 0.0
        %622 = vmatprep.subr.mxu0 0.0
        %623 = vmatpush1.msra.mxu0 0.0
        %624 = vmatprep.subr.mxu0 0.0
        %625 = vmatpush1.msra.mxu0 %v589
        %626 = vmatprep.subr.mxu0 0.0
        %627 = vmatpush2.msra.mxu0 0.0
        %628 = vmatprep.subr.mxu0 0.0
        %629 = vmatpush2.msra.mxu0 0.0
        %630 = vmatprep.subr.mxu0 0.0
        %631 = vmatpush2.msra.mxu0 0.0
        %632 = vmatprep.subr.mxu0 0.0
        %633 = vmatpush2.msra.mxu0 0.0
        %634 = vmatprep.subr.mxu0 0.0
        %635 = vmatpush2.msra.mxu0 0.0
        %636 = vmatprep.subr.mxu0 0.0
        %637 = vmatpush2.msra.mxu0 0.0
        %638 = vmatprep.subr.mxu0 0.0
        %639 = vmatpush2.msra.mxu0 0.0
        %640 = vmatprep.subr.mxu0 0.0
        %641 = vmatpush2.msra.mxu0 0.0
        %642 = vmatprep.subr.mxu0 0.0
        %643 = vmatpush2.msra.mxu0 0.0
        %644 = vmatprep.subr.mxu0 0.0
        %645 = vmatpush2.msra.mxu0 0.0
        %646 = vmatprep.subr.mxu0 0.0
        %647 = vmatpush2.msra.mxu0 0.0
        %648 = vmatprep.subr.mxu0 0.0
        %649 = vmatpush2.msra.mxu0 0.0
        %650 = vmatprep.subr.mxu0 0.0
        %651 = vmatpush2.msra.mxu0 0.0
        %652 = vmatprep.subr.mxu0 0.0
        %653 = vmatpush2.msra.mxu0 0.0
        %654 = vmatprep.subr.mxu0 0.0
        %655 = vmatpush2.msra.mxu0 0.0
        %656 = vmatprep.subr.mxu0 0.0
        %657 = vmatpush2.msra.mxu0 0.0
        %658 = vmatprep.mubr.f32.mxu0 0.0
        %659 = vmatmul.mubr.f32.gmra.mxu0 %v592
        %v660 = vpop.f32.mrf.mxu0
        %v661 = vadd.f32 0.0, %v660
        %v662 = vpop.f32.mrf.mxu0
        %663 = vdwg.mxu0
        %665 = vrot.lane.b32.xlu0 %v661, 16
        %v666 = vpop.permute.xlu0 %665
        %v668 = vsel %vm335, %v496, %v666
        %v669 = vpack.c.bf16 %v668, %v668
        %v670 = vld [vmem:[%s3] sm:$0xf]
        %v671 = vld [vmem:[%s3 + $0x4] sm:$0xf]
        %v672 = vld [vmem:[%s3 + $0x8] sm:$0xf]
        %v673 = vld [vmem:[%s3 + $0xc] sm:$0xf]
        %v678 = vunpack.c.l.b16 %v670
        %v679 = vunpack.c.l.b16 %v671
        %v680 = vunpack.c.l.b16 %v672
        %v681 = vunpack.c.l.b16 %v673
        %v682 = vpack.c.b16 %v679, %v678
        %v683 = vpack.c.b16 %v681, %v680
        %v687 = vsel %vm281, %v669, 0
        %689 = vmatprep.subr.bf16.mxu0 0
        %690 = vmatpush1.bf16.msra.mxu0 0
        %691 = vmatprep.subr.bf16.mxu0 0
        %692 = vmatpush1.bf16.msra.mxu0 0
        %693 = vmatprep.subr.bf16.mxu0 0
        %694 = vmatpush1.bf16.msra.mxu0 0
        %695 = vmatprep.subr.bf16.mxu0 0
        %696 = vmatpush1.bf16.msra.mxu0 0
        %697 = vmatprep.subr.bf16.mxu0 0
        %698 = vmatpush1.bf16.msra.mxu0 0
        %699 = vmatprep.subr.bf16.mxu0 0
        %700 = vmatpush1.bf16.msra.mxu0 0
        %701 = vmatprep.subr.bf16.mxu0 0
        %702 = vmatpush1.bf16.msra.mxu0 %v683
        %703 = vmatprep.subr.bf16.mxu0 0
        %704 = vmatpush1.bf16.msra.mxu0 %v682
        %705 = vmatprep.subr.bf16.mxu0 0
        %706 = vmatpush2.bf16.msra.mxu0 0
        %707 = vmatprep.subr.bf16.mxu0 0
        %708 = vmatpush2.bf16.msra.mxu0 0
        %709 = vmatprep.subr.bf16.mxu0 0
        %710 = vmatpush2.bf16.msra.mxu0 0
        %711 = vmatprep.subr.bf16.mxu0 0
        %712 = vmatpush2.bf16.msra.mxu0 0
        %713 = vmatprep.subr.bf16.mxu0 0
        %714 = vmatpush2.bf16.msra.mxu0 0
        %715 = vmatprep.subr.bf16.mxu0 0
        %716 = vmatpush2.bf16.msra.mxu0 0
        %717 = vmatprep.subr.bf16.mxu0 0
        %718 = vmatpush2.bf16.msra.mxu0 0
        %719 = vmatprep.subr.bf16.mxu0 0
        %720 = vmatpush2.bf16.msra.mxu0 0
        %721 = vmatprep.mubr.bf16.mxu0 0
        %722 = vmatmul.mubr.bf16.gmra.mxu0 %v687
        %v723 = vpop.f32.mrf.mxu0
        %v724 = vadd.f32 %v262, %v723
        %v725 = vpop.f32.mrf.mxu0
        %v726 = vpop.f32.mrf.mxu0
        %v727 = vpop.f32.mrf.mxu0
        %728 = vdwg.mxu0
        %v729 = vsel %vm281, %v724, 0.0
        %730 = vadd.xlane.f32.xlu0 %v729
        %v731 = vpop.xlane.xlu0 %730
        %v732 = vrcp.pop 32.0
        %v733 = vmul.f32 %v731, %v732
        %v734 = vsub.f32 %v724, %v733
        %v735 = vmul.f32 %v734, %v734
        %v736 = vsel %vm281, %v735, 0.0
        %737 = vadd.xlane.f32.xlu0 %v736
        %v738 = vpop.xlane.xlu0 %737
        %v739 = vmul.f32 %v738, %v732
        %v740 = vadd.f32 %v739, 1e-06
        %v741 = vrsqrt.pop %v740
        %v742 = vmul.f32 %v734, %v741
        %v743 = vld [vmem:[%s4] sm:$0x1]
        %v745 = vlaneseq
        %v746 = vshrl.u32 %v745, 7
        %v747 = vsub.s32 0, %v746
        %v748 = vrot.slane %v743, %v747
        %v750 = vmul.f32 %v742, %v748
        %v751 = vld [vmem:[%s5] sm:$0x1]
        %v753 = vlaneseq
        %v754 = vshrl.u32 %v753, 7
        %v755 = vsub.s32 0, %v754
        %v756 = vrot.slane %v751, %v755
        %v758 = vadd.f32 %v750, %v756
        %759 = vst.msk [vmem:[%s253] sm:$0xff] %vm281, %v758
        %s760 = sand.u32 %s164, 1
        %s761 = scalar_lea.sflag [#allocation3], %s760
        %s762 = sand.u32 %s164, 1
        %s763 = smul.addr %s762, 8
        %s764 = scalar_lea.vmem [#allocation2], %s763
        // Predicated region
        $region45: #{meta_transformer_layer.1} parent=43 // pred_check
          %p765 = pneg %p174
        $region46: #{meta_transformer_layer.1} parent=43 // pred_check_branch
          %767 = sbr.rel (%p765) target = $region48
        $region47: #{meta_transformer_layer.1} parent=43 // pred_region
          %s769 = ssub.s32 128, 128
          %770 = vsyncadd %s761, %s769
          %s771 = smul.addr %s20, 128
          %s772 = scalar_lea.hbm %s6, %s771
          %s774 = sshll.u32 %s764, 4
          %s775 = int_to_ptr.vmem [resolvable:$true] %s774
          %777 = dma.vmem_to_hbm [thread:$0]  %s775, 128, %s772, %s761
        $region48: #{meta_transformer_layer.1} parent=43 // pred_fallthru
          _
      $region44: #{meta_transformer_layer.1} parent=5 // pred_fallthru
        _
      %p778 = scmp.le.s32.totalorder 2, %s15
      // Predicated region
      $region49: #{meta_transformer_layer.1} parent=5 // pred_check
        %p779 = pneg %p778
      $region50: #{meta_transformer_layer.1} parent=5 // pred_check_branch
        %781 = sbr.rel (%p779) target = $region52
      $region51: #{meta_transformer_layer.1} parent=5 // pred_region
        %s782 = ssub.s32 %s15, 2
        // Predicated region
        $region53: #{meta_transformer_layer.1} parent=51 // pred_check
          %p783 = pneg %p180
        $region54: #{meta_transformer_layer.1} parent=51 // pred_check_branch
          %785 = sbr.rel (%p783) target = $region56
        $region55: #{meta_transformer_layer.1} parent=51 // pred_region
          %s786 = sand.u32 %s165, 1
          %s787 = scalar_lea.sflag [#allocation3], %s786
          %s788 = sand.u32 %s165, 1
          %s789 = smul.addr %s788, 8
          %s790 = scalar_lea.vmem [#allocation2], %s789
          %791 = dma.done %s787, 128
        $region56: #{meta_transformer_layer.1} parent=51 // pred_fallthru
          _
      $region52: #{meta_transformer_layer.1} parent=5 // pred_fallthru
        _
    $region6: #{meta_transformer_layer.1} parent=1 // loop_footer
      %s19 = sadd.s32 1, %s15
    $region7: #{meta_transformer_layer.1} parent=1 // loop_footer_branch
      %14 = sbr.rel target = $region3
    $region8: #{meta_transformer_layer.1} parent=1 // loop_exit
      _
    %792 = vsyncpa [#allocation3], 1
    %s793 = scalar_lea.sflag [#allocation3], 1
    %794 = vsyncpa %s793, 1

</llo_original>
